<compile_context>
chip_gen: v5e
topology: v5e:2x2
jax: 0.10.0
libtpu: 0.0.40
codegen_flags: <defaults>
</compile_context>

<pallas_src>
import jax
import jax.numpy as jnp
from jax.experimental import pallas as pl
from jax.experimental.pallas import tpu as pltpu


def _round_up(x, m):
    return (x + m - 1) // m * m


def _pick_tile(total, target, mult):
    """Largest multiple of `mult` <= target that divides `total` (or `total`)."""
    if total <= target:
        return total
    hi = (target // mult) * mult
    for cand in range(hi, 0, -mult):
        if total % cand == 0:
            return cand
    return mult


def _vmem_limit(estimate_bytes, capacity_bytes):
    """Generation-aware scoped-VMEM limit (<= 85% of physical VMEM)."""
    return int(min(0.85 * capacity_bytes, max(2 * estimate_bytes, 16 << 20)))


def _tpu_vmem_capacity():
    try:
        return int(pltpu.get_tpu_info().vmem_capacity_bytes)
    except Exception:
        return 64 << 20          # conservative: v7x per-TC VMEM


# ---------------------------------------------------------------------------
# Kernels
# ---------------------------------------------------------------------------

def _hidden_kernel(x_ref, w_ref, h_ref, acc_ref):
    """h = gelu(x @ W_eff), K-tiled over the hidden contraction axis.

    Grid: (rows Tp/tm [parallel], K H/tk [arbitrary, innermost]).
    x_ref : [tm, tk] bf16     w_ref : [tk, H] bf16 (streamed slab)
    h_ref : [tm, H]  bf16     acc_ref: [tm, H] f32 VMEM accumulator
    """
    k = pl.program_id(1)

    @pl.when(k == 0)
    def _():
        acc_ref[...] = jnp.zeros_like(acc_ref)

    acc_ref[...] += jnp.dot(x_ref[...], w_ref[...],
                            preferred_element_type=jnp.float32)

    @pl.when(k == pl.num_programs(1) - 1)
    def _():
        # GELU in f32 (v5e VPU/EUP has no bf16 path).
        # TODO(synk): PyTorch nn.GELU defaults to exact erf; the tanh
        #             approximation is used here for guaranteed Mosaic
        #             lowering — divergence covered by the test tolerance.
        h_ref[...] = jax.nn.gelu(acc_ref[...]).astype(h_ref.dtype)


def _lm_head_kernel(h_ref, head_ref, out_ref):
    """logits tile = h row-tile @ head vocab-tile (bf16 in, f32 accumulate)."""
    out_ref[...] = jnp.dot(h_ref[...], head_ref[...],
                           preferred_element_type=jnp.float32)


# ---------------------------------------------------------------------------
# Parameter preparation (one-time) and forward pass
# ---------------------------------------------------------------------------

def prepare_params(raw, *, lora_rank, lora_alpha):
    """One-time LoRA merge + bf16 cast + lane-dense vocab padding.

    Doing this once (instead of per forward call) removes full H x V HBM
    copies from the forward path.  Merge is mathematically identical to
    x @ W + (alpha/rank) * (x @ A) @ B, i.e. LoRAModel.merge_loras semantics.
    """
    scale = float(lora_alpha) / float(lora_rank)
    w_eff = (raw["w"].astype(jnp.float32)
             + scale * (raw["lora_a"].astype(jnp.float32)
                        @ raw["lora_b"].astype(jnp.float32)))
    V, _ = raw["embed"].shape
    Vp = _round_up(V, 128)
    head = raw["head"].astype(jnp.bfloat16)
    if Vp != V:
        head = jnp.pad(head, ((0, 0), (0, Vp - V)))
    return {
        "embed": raw["embed"].astype(jnp.bfloat16),   # (V, H)
        "w_eff": w_eff.astype(jnp.bfloat16),          # (H, H)
        "head": head,                                 # (H, Vp) pre-padded
        "vocab": V,
    }


def lora_lm_forward(token_ids, prepared, *, tm=None, tn=None, tk=None):
    """Forward pass: (B, S) int32 token ids -> (B, S, V) float32 logits."""
    embed = prepared["embed"]                          # (V, H) bf16
    w_eff = prepared["w_eff"]                          # (H, H) bf16
    head = prepared["head"]                            # (H, Vp) bf16
    V = prepared["vocab"]
    H = embed.shape[1]
    Vp = head.shape[1]
    B, S = token_ids.shape
    T = B * S

    # Per-generation tile defaults.  Head tiles are re-streamed Tp/tm times,
    # so tm must exceed the chip's FLOP/byte crossover (v6e ~650, v7x ~310).
    vmem_cap = _tpu_vmem_capacity()
    big_vmem = vmem_cap >= (100 << 20)                 # v5e / v6e (128 MiB)
    if tm is None:
        tm = 1024 if big_vmem else 512
    if tn is None:
        tn = 1024 if big_vmem else 512
    if tk is None:
        tk = 512

    # Row tiles: multiples of 16 (bf16 packs two rows per sublane).
    tm = min(tm, _round_up(T, 16))
    Tp = _round_up(T, tm)
    # Vocab tiles: lane-dense multiples of 128 dividing the pre-padded vocab.
    tn = _pick_tile(Vp, tn, 128)
    # K tiles over the hidden contraction: multiples of 128 dividing H, else H.
    tk = _pick_tile(H, tk, 128) if H % 128 == 0 else H

    # TODO(synk): embedding gather stays in plain JAX; could be fused via
    #             PrefetchScalarGridSpec(num_scalar_prefetch=1) + pl.Element
    #             row-gather on embed to save a (T, H) HBM round trip.
    x = embed[token_ids.reshape(-1)]                   # (T, H) bf16
    if Tp != T:
        x = jnp.pad(x, ((0, Tp - T), (0, 0)))

    # ---- Stage 1: h = gelu(x @ W_eff), K-tiled (VMEM use O(tk*H)) ----------
    grid1 = (Tp // tm, H // tk)
    vmem1 = (2 * tm * tk * 2          # x tiles (bf16, double buffered)
             + 2 * tk * H * 2         # W_eff slabs (bf16, double buffered)
             + 2 * tm * H * 2         # h output tiles (bf16, double buffered)
             + tm * H * 4)            # f32 accumulator scratch
    cost1 = pl.CostEstimate(
        flops=2 * Tp * H * H,
        transcendentals=Tp * H,
        bytes_accessed=(Tp * H * 2                       # x
                        + (Tp // tm) * H * H * 2         # W_eff re-streamed
                        + Tp * H * 2),                   # h out
    )
    hidden = pl.pallas_call(
        _hidden_kernel,
        out_shape=jax.ShapeDtypeStruct((Tp, H), jnp.bfloat16),
        grid_spec=pltpu.PrefetchScalarGridSpec(
            num_scalar_prefetch=0,
            grid=grid1,
            in_specs=[
                pl.BlockSpec((tm, tk), lambda i, k: (i, k)),   # x row/K tile
                pl.BlockSpec((tk, H), lambda i, k: (k, 0)),    # W_eff slab
            ],
            out_specs=pl.BlockSpec((tm, H), lambda i, k: (i, 0)),
            scratch_shapes=[pltpu.VMEM((tm, H), jnp.float32)],
        ),
        compiler_params=pltpu.CompilerParams(
            dimension_semantics=("parallel", "arbitrary"),
            vmem_limit_bytes=_vmem_limit(vmem1, vmem_cap),
        ),
        cost_estimate=cost1,
    )(x, w_eff)

    # ---- Stage 2: logits = h @ head, vocab-tiled ----------------------------
    grid2 = (Tp // tm, Vp // tn)
    vmem2 = (2 * tm * H * 2           # h row tiles (bf16, double buffered)
             + 2 * H * tn * 2         # head tiles (bf16, double buffered)
             + 2 * tm * tn * 4)       # f32 logits tiles (double buffered)
    cost2 = pl.CostEstimate(
        flops=2 * Tp * H * Vp,
        transcendentals=0,
        bytes_accessed=(Tp * H * 2                       # h (once per row tile)
                        + (Tp // tm) * H * Vp * 2        # head re-streamed
                        + Tp * Vp * 4),                  # logits out
    )
    # TODO(synk): f32 logits kept for fidelity with the PyTorch reference;
    #             bf16 output or a fused log_softmax would halve HBM writes.
    logits = pl.pallas_call(
        _lm_head_kernel,
        out_shape=jax.ShapeDtypeStruct((Tp, Vp), jnp.float32),
        grid_spec=pltpu.PrefetchScalarGridSpec(
            num_scalar_prefetch=0,
            grid=grid2,
            in_specs=[
                pl.BlockSpec((tm, H), lambda i, j: (i, 0)),    # h row tile
                pl.BlockSpec((H, tn), lambda i, j: (0, j)),    # head stream
            ],
            out_specs=pl.BlockSpec((tm, tn), lambda i, j: (i, j)),
        ),
        compiler_params=pltpu.CompilerParams(
            dimension_semantics=("parallel", "parallel"),
            vmem_limit_bytes=_vmem_limit(vmem2, vmem_cap),
        ),
        cost_estimate=cost2,
    )(hidden, head)

    if Tp != T or Vp != V:
        logits = logits[:T, :V]
    return logits.reshape(B, S, V)


# ---------------------------------------------------------------------------
# Parameter init (demo)
# ---------------------------------------------------------------------------

def init_params(key, *, vocab, hidden, lora_rank):
    k_embed, k_w, k_a, k_head = jax.random.split(key, 4)
    return {
        "embed": jax.random.normal(k_embed, (vocab, hidden), jnp.float32) * 0.02,
        "w": jax.random.normal(k_w, (hidden, hidden), jnp.float32) * 0.02,
        # LoRA: A ~ N(0, 0.02), B initialized to zero (standard LoRA init).
        "lora_a": jax.random.normal(k_a, (hidden, lora_rank), jnp.float32) * 0.02,
        "lora_b": jnp.zeros((lora_rank, hidden), jnp.float32),
        "head": jax.random.normal(k_head, (hidden, vocab), jnp.float32) * 0.02,
    }


if __name__ == "__main__":
    # Small, deterministic configuration consistent with a causal-LM forward.
    B, S = 2, 8          # batch, sequence length
    H = 32               # hidden size
    V = 128              # vocabulary size
    LORA_RANK = 4
    LORA_ALPHA = float(LORA_RANK)   # args.lora_alpha defaults to lora_rank

    key = jax.random.PRNGKey(0)
    k_params, k_tokens = jax.random.split(key)

    raw_params = init_params(k_params, vocab=V, hidden=H, lora_rank=LORA_RANK)
    token_ids = jax.random.randint(k_tokens, (B, S), 0, V, dtype=jnp.int32)

    prepared = prepare_params(raw_params, lora_rank=LORA_RANK,
                              lora_alpha=LORA_ALPHA)
    logits = lora_lm_forward(token_ids, prepared)
    logits = jax.block_until_ready(logits)

    assert logits.shape == (B, S, V), logits.shape
    assert logits.dtype == jnp.float32, logits.dtype
    assert bool(jnp.all(jnp.isfinite(logits)))

    # Pure-JAX f32 reference (loose tolerance: kernel uses bf16 MXU inputs;
    # both use tanh-approx GELU, see TODO in _hidden_kernel).
    scale = LORA_ALPHA / LORA_RANK
    w_eff_ref = raw_params["w"] + scale * (raw_params["lora_a"]
                                           @ raw_params["lora_b"])
    x_ref = raw_params["embed"][token_ids.reshape(-1)]
    ref = (jax.nn.gelu(x_ref @ w_eff_ref) @ raw_params["head"]).reshape(B, S, V)
    assert bool(jnp.allclose(logits, ref, rtol=5e-2, atol=2e-3)), (
        float(jnp.max(jnp.abs(logits - ref))))

    print("KERNEL_OK")
</pallas_src>

<mosaic_0001>
module attributes {stable_mosaic.version = 11 : i64} {
  func.func @_hidden_kernel(%arg0: i32, %arg1: i32, %arg2: memref<16x32xbf16, #tpu.memory_space<vmem>>, %arg3: memref<32x32xbf16, #tpu.memory_space<vmem>>, %arg4: memref<16x32xbf16, #tpu.memory_space<vmem>>, %arg5: memref<16x32xf32, #tpu.memory_space<vmem>>) attributes {dimension_semantics = [#tpu.dimension_semantics<parallel>, #tpu.dimension_semantics<arbitrary>], iteration_bounds = array<i64: 1, 1>, scalar_prefetch = 0 : i64, scratch_operands = 1 : i64, tpu.core_type = #tpu.core_type<tc>, window_params = [{transform_indices = @transform_0, window_bounds = array<i64: 16, 32>}, {transform_indices = @transform_1, window_bounds = array<i64: 32, 32>}, {transform_indices = @transform_2, window_bounds = array<i64: 16, 32>}]} {
    %c0_i32 = arith.constant 0 : i32
    %0 = arith.cmpi eq, %arg1, %c0_i32 : i32
    %1 = arith.extui %0 : i1 to i32
    %c0_i32_0 = arith.constant 0 : i32
    %2 = arith.cmpi ne, %1, %c0_i32_0 : i32
    scf.if %2 {
      %cst_10 = arith.constant 0.000000e+00 : f32
      %12 = vector.broadcast %cst_10 : f32 to vector<16x32xf32>
      %c0_11 = arith.constant 0 : index
      %c0_12 = arith.constant 0 : index
      %13 = vector.load %arg5[%c0_11, %c0_12] : memref<16x32xf32, #tpu.memory_space<vmem>>, vector<16x32xf32>
      tpu.vector_store %arg5[%c0_11, %c0_12], %12 {strides = array<i32>} : memref<16x32xf32, #tpu.memory_space<vmem>>, vector<16x32xf32>,
    } else {
    }
    %c0 = arith.constant 0 : index
    %c0_1 = arith.constant 0 : index
    %3 = vector.load %arg5[%c0, %c0_1] : memref<16x32xf32, #tpu.memory_space<vmem>>, vector<16x32xf32>
    %c0_2 = arith.constant 0 : index
    %c0_3 = arith.constant 0 : index
    %4 = vector.load %arg2[%c0_2, %c0_3] : memref<16x32xbf16, #tpu.memory_space<vmem>>, vector<16x32xbf16>
    %c0_4 = arith.constant 0 : index
    %c0_5 = arith.constant 0 : index
    %5 = vector.load %arg3[%c0_4, %c0_5] : memref<32x32xbf16, #tpu.memory_space<vmem>>, vector<32x32xbf16>
    %cst = arith.constant dense<0.000000e+00> : vector<16x32xf32>
    %6 = tpu.matmul %4, %5, %cst {dimension_numbers = #tpu.dot_dimension_numbers<[1], [0], [0], [1], [0, 0, 1, 1], [], []>} : vector<16x32xbf16>, vector<32x32xbf16>, vector<16x32xf32> -> vector<16x32xf32>
    %7 = arith.addf %3, %6 : vector<16x32xf32>
    %c0_6 = arith.constant 0 : index
    %c0_7 = arith.constant 0 : index
    %8 = vector.load %arg5[%c0_6, %c0_7] : memref<16x32xf32, #tpu.memory_space<vmem>>, vector<16x32xf32>
    tpu.vector_store %arg5[%c0_6, %c0_7], %7 {strides = array<i32>} : memref<16x32xf32, #tpu.memory_space<vmem>>, vector<16x32xf32>,
    %c0_i32_8 = arith.constant 0 : i32
    %9 = arith.cmpi eq, %arg1, %c0_i32_8 : i32
    %10 = arith.extui %9 : i1 to i32
    %c0_i32_9 = arith.constant 0 : i32
    %11 = arith.cmpi ne, %10, %c0_i32_9 : i32
    scf.if %11 {
      %c0_10 = arith.constant 0 : index
      %c0_11 = arith.constant 0 : index
      %12 = vector.load %arg5[%c0_10, %c0_11] : memref<16x32xf32, #tpu.memory_space<vmem>>, vector<16x32xf32>
      %13 = arith.mulf %12, %12 : vector<16x32xf32>
      %14 = arith.mulf %12, %13 : vector<16x32xf32>
      %cst_12 = arith.constant 4.471500e-02 : f32
      %15 = vector.broadcast %cst_12 : f32 to vector<16x32xf32>
      %16 = arith.mulf %15, %14 : vector<16x32xf32>
      %17 = arith.addf %12, %16 : vector<16x32xf32>
      %cst_13 = arith.constant 0.797884583 : f32
      %18 = vector.broadcast %cst_13 : f32 to vector<16x32xf32>
      %19 = arith.mulf %18, %17 : vector<16x32xf32>
      %20 = math.tanh %19 : vector<16x32xf32>
      %cst_14 = arith.constant 1.000000e+00 : f32
      %21 = vector.broadcast %cst_14 : f32 to vector<16x32xf32>
      %22 = arith.addf %21, %20 : vector<16x32xf32>
      %cst_15 = arith.constant 5.000000e-01 : f32
      %23 = vector.broadcast %cst_15 : f32 to vector<16x32xf32>
      %24 = arith.mulf %23, %22 : vector<16x32xf32>
      %25 = arith.mulf %12, %24 : vector<16x32xf32>
      %26 = arith.truncf %25 : vector<16x32xf32> to vector<16x32xbf16>
      %c0_16 = arith.constant 0 : index
      %c0_17 = arith.constant 0 : index
      %27 = vector.load %arg4[%c0_16, %c0_17] : memref<16x32xbf16, #tpu.memory_space<vmem>>, vector<16x32xbf16>
      tpu.vector_store %arg4[%c0_16, %c0_17], %26 {strides = array<i32>} : memref<16x32xbf16, #tpu.memory_space<vmem>>, vector<16x32xbf16>,
    } else {
    }
    return
  }
  func.func @transform_0(%arg0: i32, %arg1: i32) -> (i32, i32) {
    %c0_i32 = arith.constant 0 : i32
    return %arg0, %arg1 : i32, i32
  }
  func.func @transform_1(%arg0: i32, %arg1: i32) -> (i32, i32) {
    %c0_i32 = arith.constant 0 : i32
    %c0_i32_0 = arith.constant 0 : i32
    return %arg1, %c0_i32 : i32, i32
  }
  func.func @transform_2(%arg0: i32, %arg1: i32) -> (i32, i32) {
    %c0_i32 = arith.constant 0 : i32
    %c0_i32_0 = arith.constant 0 : i32
    return %arg0, %c0_i32 : i32, i32
  }
}

</mosaic_0001>

<llo_original>
// kernel: tpu_custom_call.1
$region0: #{tpu_custom_call.1}
  #allocation0 [shape = 'u32[]', space=smem, size = 0x4, offset = 0x4, fixed_abs, tag = 'smem constant byte address 0x4 - core index']
  #allocation1 [shape = 'u32[72,128]{1,0:T(1,128)}', space=vmem, size = 0x9000, scoped, tag = 'internal scratch']
  #allocation2 [shape = 'f32[16,32]{1,0:T(8,128)}', space=vmem, size = 0x2000, scoped, tag = 'scratch operand']
  %s0 = inlined_call_operand.hbm [shape: bf16[16,32], index: 0, kind: input, shape index: {}]
  %s1 = inlined_call_operand.hbm [shape: bf16[32,32], index: 1, kind: input, shape index: {}]
  %s2 = inlined_call_operand.hbm [shape: bf16[16,32], index: 2, kind: output, shape index: {}]
  %s3 = sld [smem:[#allocation0]]
  $region34: #{tpu_custom_call.1} parent=0
    _
  %s5 = ssub.s32 1, %s3
  %s6 = scalar_select 0, %s5, %s3
  $region1: #{tpu_custom_call.1} parent=0
    #allocation3 [shape = 'u8[4096]{0}', space=vmem, size = 0x1000, scoped, tag = 'input window, operand 0, single buffered']
    #allocation4 [shape = 's32[1]{0}', space=sflag, size = 0x4, scoped, tag = 'scoped memory for tpu_custom_call.1']
    #allocation5 [shape = 's32[1]{0}', space=sflag, size = 0x4, scoped, tag = 'scoped memory for tpu_custom_call.1']
    #allocation6 [shape = 'u8[8192]{0}', space=vmem, size = 0x2000, scoped, tag = 'input window, operand 1, single buffered']
    #allocation7 [shape = 's32[1]{0}', space=sflag, size = 0x4, scoped, tag = 'scoped memory for tpu_custom_call.1']
    #allocation8 [shape = 'u8[4096]{0}', space=vmem, size = 0x1000, scoped, tag = 'output window, operand 0, single buffered']
    %7 = vsyncpa [#allocation4], 0
    %8 = vsyncpa [#allocation7], 0
    %9 = vsyncpa [#allocation5], 0
    // Predicated region
    $region2: #{tpu_custom_call.1} parent=1 // pred_check
      _
    $region3: #{tpu_custom_call.1} parent=1 // pred_check_branch
      %11 = sbr.rel (0) target = $region5
    $region4: #{tpu_custom_call.1} parent=1 // pred_region
      %13 = vsyncadd [#allocation4], 0
      %s14 = sshll.u32 %s0, 4
      %s15 = int_to_ptr.hbm [resolvable:$true] %s14
      %s16 = sshll.u32 [#allocation3], 4
      %s17 = int_to_ptr.vmem [resolvable:$true] %s16
      %22 = dma.hbm_to_vmem [thread:$0]  %s15, 128, %s17, [#allocation4], 64, 64, 4
    $region5: #{tpu_custom_call.1} parent=1 // pred_fallthru
      _
    // Predicated region
    $region6: #{tpu_custom_call.1} parent=1 // pred_check
      _
    $region7: #{tpu_custom_call.1} parent=1 // pred_check_branch
      %24 = sbr.rel (0) target = $region9
    $region8: #{tpu_custom_call.1} parent=1 // pred_region
      %26 = vsyncadd [#allocation7], 0
      %s27 = sshll.u32 %s1, 4
      %s28 = int_to_ptr.hbm [resolvable:$true] %s27
      %s29 = sshll.u32 [#allocation6], 4
      %s30 = int_to_ptr.vmem [resolvable:$true] %s29
      %35 = dma.hbm_to_vmem [thread:$0]  %s28, 256, %s30, [#allocation7], 64, 64, 4
    $region9: #{tpu_custom_call.1} parent=1 // pred_fallthru
      _
    // Predicated region
    $region10: #{tpu_custom_call.1} parent=1 // pred_check
      _
    $region11: #{tpu_custom_call.1} parent=1 // pred_check_branch
      %37 = sbr.rel (0) target = $region13
    $region12: #{tpu_custom_call.1} parent=1 // pred_region
      %39 = dma.done [#allocation4], 128
    $region13: #{tpu_custom_call.1} parent=1 // pred_fallthru
      _
    // Predicated region
    $region14: #{tpu_custom_call.1} parent=1 // pred_check
      _
    $region15: #{tpu_custom_call.1} parent=1 // pred_check_branch
      %41 = sbr.rel (0) target = $region17
    $region16: #{tpu_custom_call.1} parent=1 // pred_region
      %43 = dma.done [#allocation7], 256
    $region17: #{tpu_custom_call.1} parent=1 // pred_fallthru
      _
    %p45 = scmp.eq.s32.totalorder 0, 0
    // Predicated region
    $region18: #{tpu_custom_call.1} parent=1 // pred_check
      %p46 = pneg %p45
    $region19: #{tpu_custom_call.1} parent=1 // pred_check_branch
      %48 = sbr.rel (%p46) target = $region21
    $region20: #{tpu_custom_call.1} parent=1 // pred_region
      %vm49 = vcmask 261120
      %50 = vst.msk [vmem:[#allocation2] sm:$0xff] %vm49, 0.0
      %51 = vst.msk [vmem:[#allocation2 + $0x8] sm:$0xff] %vm49, 0.0
    $region21: #{tpu_custom_call.1} parent=1 // pred_fallthru
      _
    %v52 = vld [vmem:[#allocation2] sm:$0xff]
    %v53 = vld [vmem:[#allocation2 + $0x8] sm:$0xff]
    %v54 = vld [vmem:[#allocation3] sm:$0xf]
    %v55 = vld [vmem:[#allocation3 + $0x4] sm:$0xf]
    %v56 = vld [vmem:[#allocation6] sm:$0xf]
    %v57 = vld [vmem:[#allocation6 + $0x4] sm:$0xf]
    %v58 = vld [vmem:[#allocation6 + $0x8] sm:$0xf]
    %v59 = vld [vmem:[#allocation6 + $0xc] sm:$0xf]
    %v62 = vunpack.c.l.b16 %v54
    %v63 = vunpack.c.l.b16 %v55
    %v64 = vpack.c.b16 %v63, %v62
    %v69 = vunpack.c.l.b16 %v56
    %v70 = vunpack.c.l.b16 %v57
    %v71 = vunpack.c.l.b16 %v58
    %v72 = vunpack.c.l.b16 %v59
    %v73 = vpack.c.b16 %v70, %v69
    %v74 = vpack.c.b16 %v72, %v71
    %vm77 = vcmask 261120
    %v79 = vsel %vm77, %v64, 0
    %81 = vmatpush.bf16.msra.mxu0 0
    %82 = vmatpush.bf16.msra.mxu0 0
    %83 = vmatpush.bf16.msra.mxu0 0
    %84 = vmatpush.bf16.msra.mxu0 0
    %85 = vmatpush.bf16.msra.mxu0 0
    %86 = vmatpush.bf16.msra.mxu0 0
    %87 = vmatpush.bf16.msra.mxu0 %v74
    %88 = vmatpush.bf16.msra.mxu0 %v73
    %89 = vmatmul.bf16.gmra.mxu0 %v79
    %v90 = vpop.f32.mrf.mxu0
    %v91 = vadd.f32 0.0, %v90
    %v92 = vpop.f32.mrf.mxu0
    %v93 = vadd.f32 0.0, %v92
    %94 = vdwg.mxu0
    %v95 = vadd.f32 %v52, %v91
    %v96 = vadd.f32 %v53, %v93
    %97 = vst.msk [vmem:[#allocation2] sm:$0xff] %vm77, %v95
    %98 = vst.msk [vmem:[#allocation2 + $0x8] sm:$0xff] %vm77, %v96
    // Predicated region
    $region22: #{tpu_custom_call.1} parent=1 // pred_check
      %p99 = pneg %p45
    $region23: #{tpu_custom_call.1} parent=1 // pred_check_branch
      %101 = sbr.rel (%p99) target = $region25
    $region24: #{tpu_custom_call.1} parent=1 // pred_region
      %v102 = vld [vmem:[#allocation2] sm:$0xff]
      %v103 = vld [vmem:[#allocation2 + $0x8] sm:$0xff]
      %v104 = vmul.f32 %v102, %v102
      %v105 = vmul.f32 %v103, %v103
      %v106 = vmul.f32 %v102, %v104
      %v107 = vmul.f32 %v103, %v105
      %v108 = vmul.f32 %v106, 0.044715
      %v109 = vmul.f32 %v107, 0.044715
      %v110 = vadd.f32 %v102, %v108
      %v111 = vadd.f32 %v103, %v109
      %v112 = vmul.f32 %v110, 0.7978846
      %v113 = vmul.f32 %v111, 0.7978846
      %v114 = vtanh.pop %v112
      %v115 = vtanh.pop %v113
      %v116 = vadd.f32 %v114, 1.0
      %v117 = vadd.f32 %v115, 1.0
      %v118 = vmul.f32 %v116, 0.5
      %v119 = vmul.f32 %v117, 0.5
      %v120 = vmul.f32 %v102, %v118
      %v121 = vmul.f32 %v103, %v119
      %v122 = vpack.c.bf16 %v120, %v120
      %v123 = vpack.c.bf16 %v121, %v121
      %vm124 = vcmask 257024
      %125 = vst.msk [vmem:[#allocation8] sm:$0xf] %vm124, %v122
      %126 = vst.msk [vmem:[#allocation8 + $0x4] sm:$0xf] %vm124, %v123
    $region25: #{tpu_custom_call.1} parent=1 // pred_fallthru
      _
    // Predicated region
    $region26: #{tpu_custom_call.1} parent=1 // pred_check
      _
    $region27: #{tpu_custom_call.1} parent=1 // pred_check_branch
      %128 = sbr.rel (0) target = $region29
    $region28: #{tpu_custom_call.1} parent=1 // pred_region
      %130 = vsyncadd [#allocation5], 0
      %s131 = sshll.u32 [#allocation8], 4
      %s132 = int_to_ptr.vmem [resolvable:$true] %s131
      %s133 = sshll.u32 %s2, 4
      %s134 = int_to_ptr.hbm [resolvable:$true] %s133
      %139 = dma.vmem_to_hbm [thread:$0]  %s132, 128, %s134, [#allocation5], 64, 64, 4
    $region29: #{tpu_custom_call.1} parent=1 // pred_fallthru
      _
    // Predicated region
    $region30: #{tpu_custom_call.1} parent=1 // pred_check
      _
    $region31: #{tpu_custom_call.1} parent=1 // pred_check_branch
      %141 = sbr.rel (0) target = $region33
    $region32: #{tpu_custom_call.1} parent=1 // pred_region
      %143 = dma.done [#allocation5], 128
    $region33: #{tpu_custom_call.1} parent=1 // pred_fallthru
      _
    %144 = vsyncpa [#allocation4], 1
    %145 = vsyncpa [#allocation7], 1
    %146 = vsyncpa [#allocation5], 1

</llo_original>
